<compile_context>
chip_gen: v6e
topology: v6e:2x2x1
jax: 0.10.0
libtpu: 0.0.40
codegen_flags: <defaults>
</compile_context>

<pallas_src>
import jax
import jax.numpy as jnp
import numpy as np
from jax.experimental import pallas as pl
from jax.experimental.pallas import tpu as pltpu  # noqa: F401  (TPU backend assumed)

BN_EPS = 1e-5
H1_REAL = 64        # logical hidden-1 width
H2 = 128            # hidden-2 width
NET_LANE = 128      # lane slot per network (hidden / output padded to this)


def ddqn_forward_kernel(x_ref, w_ref, vec_ref, out_ref):
    """Fused Linear->BN->ReLU x2 -> Linear for ALL lane-packed networks at once."""
    spad = x_ref.shape[1]          # padded state_dim (static)
    lanes = w_ref.shape[1]         # num_nets * 128   (static)

    x = x_ref[...].astype(jnp.bfloat16)                    # (B, spad)

    # Static, tile-aligned slices of the single weight slab (free views).
    w1 = w_ref[0:spad, :]                                  # (spad, lanes)
    w2 = w_ref[spad:spad + lanes, :]                       # (lanes, lanes) block-diag
    w3 = w_ref[spad + lanes:spad + 2 * lanes, :]           # (lanes, lanes) block-diag

    def bn_relu(h, g, beta):
        # Training-mode BatchNorm1d (per-batch stats, biased variance) + ReLU,
        # folded into a single multiply-add per element.  Padded columns have
        # g = beta = 0, so they stay exactly zero.
        m = jnp.mean(h, axis=0, keepdims=True)
        v = jnp.maximum(jnp.mean(h * h, axis=0, keepdims=True) - m * m, 0.0)
        s = g * jax.lax.rsqrt(v + BN_EPS)
        t = beta - m * s
        return jnp.maximum(h * s + t, 0.0)

    # ---- Linear(S -> 64, lane-packed/padded) + BN + ReLU (bias cancelled) ---
    h1 = jnp.dot(x, w1, preferred_element_type=jnp.float32)
    h1 = bn_relu(h1, vec_ref[0:1, :], vec_ref[1:2, :])

    # ---- Linear(64 -> 128) + BN + ReLU (block-diagonal across nets) ---------
    h2 = jnp.dot(h1.astype(jnp.bfloat16), w2, preferred_element_type=jnp.float32)
    h2 = bn_relu(h2, vec_ref[2:3, :], vec_ref[3:4, :])

    # ---- Linear(128 -> action_dim, lane-padded) + bias ----------------------
    out = jnp.dot(h2.astype(jnp.bfloat16), w3,
                  preferred_element_type=jnp.float32) + vec_ref[4:5, :]
    out_ref[...] = out.astype(out_ref.dtype)


def pack_params(per_net_params, state_dim, action_dim):
    """Fold / pad / lane-pack PyTorch-style per-network params for the kernel.

    Each entry is (w1, b1, g1, be1, w2, b2, g2, be2, w3, b3) with weights stored
    as (in_features, out_features).  b1/b2 are dropped (exactly cancelled by
    training-mode BN).  Returns:
      w_slab: (spad + 2*lanes, lanes) bf16 — w1 lane-packed, w2/w3 block-diag,
              sublane-stacked into a single DMA operand.
      vec:    (8, lanes) f32 — g1, be1, g2, be2, b3 rows (padded entries zero).
    """
    num_nets = len(per_net_params)
    lanes = num_nets * NET_LANE
    spad = ((state_dim + 15) // 16) * 16      # bf16 sublane-tile alignment

    w1p = jnp.zeros((spad, lanes), jnp.float32)
    w2p = jnp.zeros((lanes, lanes), jnp.float32)
    w3p = jnp.zeros((lanes, lanes), jnp.float32)
    vec = jnp.zeros((8, lanes), jnp.float32)

    for n, (w1, b1, g1, be1, w2, b2, g2, be2, w3, b3) in enumerate(per_net_params):
        assert w1.shape == (state_dim, H1_REAL)
        assert w2.shape == (H1_REAL, H2)
        assert w3.shape == (H2, action_dim)
        c = n * NET_LANE
        w1p = w1p.at[:state_dim, c:c + H1_REAL].set(w1)
        w2p = w2p.at[c:c + H1_REAL, c:c + H2].set(w2)
        w3p = w3p.at[c:c + H2, c:c + action_dim].set(w3)
        vec = vec.at[0, c:c + H1_REAL].set(g1.reshape(-1))
        vec = vec.at[1, c:c + H1_REAL].set(be1.reshape(-1))
        vec = vec.at[2, c:c + H2].set(g2.reshape(-1))
        vec = vec.at[3, c:c + H2].set(be2.reshape(-1))
        vec = vec.at[4, c:c + action_dim].set(b3.reshape(-1))

    w_slab = jnp.concatenate([w1p, w2p, w3p], axis=0).astype(jnp.bfloat16)

    # Guard the padding invariant the exactness argument relies on:
    # padded gamma/beta and padded w1 columns must be zero.
    vec_np, w1_np = np.asarray(vec), np.asarray(w1p)
    for n in range(num_nets):
        pad1 = slice(n * NET_LANE + H1_REAL, (n + 1) * NET_LANE)
        assert not np.any(vec_np[0, pad1]) and not np.any(vec_np[1, pad1])
        assert not np.any(w1_np[:, pad1])

    return w_slab, vec


def ddqn_forward(state, packed, action_dim):
    """Evaluate all lane-packed networks on `state` with one grid-less pallas_call."""
    w_slab, vec = packed
    lanes = w_slab.shape[1]
    num_nets = lanes // NET_LANE
    spad = w_slab.shape[0] - 2 * lanes
    batch, state_dim = state.shape

    x = state
    if state_dim < spad:
        # TODO(synk): only triggers for state_dim not a multiple of 16.
        x = jnp.pad(x, ((0, 0), (0, spad - state_dim)))

    out = pl.pallas_call(
        ddqn_forward_kernel,
        out_shape=jax.ShapeDtypeStruct((batch, lanes), jnp.float32),
        in_specs=[
            pl.BlockSpec((batch, spad), lambda: (0, 0)),        # state (f32)
            pl.BlockSpec(w_slab.shape, lambda: (0, 0)),         # all weights, 1 DMA
            pl.BlockSpec(vec.shape, lambda: (0, 0)),            # per-feature slab
        ],
        out_specs=pl.BlockSpec((batch, lanes), lambda: (0, 0)),
    )(x, w_slab, vec)

    # Un-pack the lane axis: columns [n*128 : n*128+action_dim] belong to net n.
    return jnp.stack([out[:, n * NET_LANE:n * NET_LANE + action_dim]
                      for n in range(num_nets)])


def init_params(key, state_dim, action_dim):
    """Deterministic synthetic parameters (PyTorch-Linear-style uniform init)."""
    ks = jax.random.split(key, 6)

    def linear_init(kw, kb, fan_in, fan_out):
        bound = float(fan_in) ** -0.5
        # stored as (in, out) == W^T of the PyTorch (out, in) weight
        w = jax.random.uniform(kw, (fan_in, fan_out), jnp.float32, -bound, bound)
        b = jax.random.uniform(kb, (1, fan_out), jnp.float32, -bound, bound)
        return w, b

    w1, b1 = linear_init(ks[0], ks[1], state_dim, H1_REAL)
    w2, b2 = linear_init(ks[2], ks[3], H1_REAL, H2)
    w3, b3 = linear_init(ks[4], ks[5], H2, action_dim)
    g1, be1 = jnp.ones((1, H1_REAL), jnp.float32), jnp.zeros((1, H1_REAL), jnp.float32)
    g2, be2 = jnp.ones((1, H2), jnp.float32), jnp.zeros((1, H2), jnp.float32)
    return (w1, b1, g1, be1, w2, b2, g2, be2, w3, b3)


def ddqn_forward_ref(state, params, matmul_dtype=jnp.float32):
    """Pure-JAX reference with exact PyTorch-module (training-mode BN) semantics.

    matmul_dtype=jnp.bfloat16 reproduces the kernel's MXU input precision.
    """
    (w1, b1, g1, be1, w2, b2, g2, be2, w3, b3) = params

    def lin(x, w, b):
        return jnp.dot(x.astype(matmul_dtype), w.astype(matmul_dtype),
                       preferred_element_type=jnp.float32) + b

    def bn_relu(h, g, be):
        m = jnp.mean(h, axis=0, keepdims=True)
        v = jnp.mean((h - m) ** 2, axis=0, keepdims=True)
        return jnp.maximum((h - m) * jax.lax.rsqrt(v + BN_EPS) * g + be, 0.0)

    h1 = bn_relu(lin(state, w1, b1), g1, be1)
    h2 = bn_relu(lin(h1, w2, b2), g2, be2)
    return lin(h2, w3, b3)


if __name__ == "__main__":
    key = jax.random.PRNGKey(0)
    k_x, k_online, k_target = jax.random.split(key, 3)

    batch, state_dim, action_dim = 8, 32, 8
    state = jax.random.normal(k_x, (batch, state_dim), jnp.float32)

    # Online + target Q-networks, lane-packed into a single grid-less pallas_call.
    nets = [init_params(k_online, state_dim, action_dim),
            init_params(k_target, state_dim, action_dim)]
    packed = pack_params(nets, state_dim, action_dim)

    out = ddqn_forward(state, packed, action_dim)          # (2, batch, action_dim)
    out = jax.block_until_ready(out)
    assert out.shape == (len(nets), batch, action_dim)

    for i, p in enumerate(nets):
        # Tight check vs a reference matching the kernel's bf16 MXU inputs.
        ref_bf16 = ddqn_forward_ref(state, p, matmul_dtype=jnp.bfloat16)
        assert jnp.allclose(out[i], ref_bf16, atol=5e-3, rtol=5e-3), \
            f"net {i}: mismatch vs bf16-matmul reference"
        # Loose check vs the exact f32 PyTorch-module semantics.
        ref_f32 = ddqn_forward_ref(state, p, matmul_dtype=jnp.float32)
        assert jnp.allclose(out[i], ref_f32, atol=5e-2, rtol=5e-2), \
            f"net {i}: mismatch vs f32 reference"

    print("KERNEL_OK")
</pallas_src>

<mosaic_0001>
module attributes {stable_mosaic.version = 11 : i64} {
  func.func @ddqn_forward_kernel(%arg0: memref<8x32xf32, #tpu.memory_space<vmem>>, %arg1: memref<544x256xbf16, #tpu.memory_space<vmem>>, %arg2: memref<8x256xf32, #tpu.memory_space<vmem>>, %arg3: memref<8x256xf32, #tpu.memory_space<vmem>>) attributes {dimension_semantics = [], scalar_prefetch = 0 : i64, scratch_operands = 0 : i64, tpu.core_type = #tpu.core_type<tc>} {
    %c0 = arith.constant 0 : index
    %c0_0 = arith.constant 0 : index
    %0 = vector.load %arg0[%c0, %c0_0] : memref<8x32xf32, #tpu.memory_space<vmem>>, vector<8x32xf32>
    %1 = arith.truncf %0 : vector<8x32xf32> to vector<8x32xbf16>
    %c0_1 = arith.constant 0 : index
    %c0_2 = arith.constant 0 : index
    %2 = vector.load %arg1[%c0_1, %c0_2] : memref<544x256xbf16, #tpu.memory_space<vmem>>, vector<32x256xbf16>
    %c32 = arith.constant 32 : index
    %c0_3 = arith.constant 0 : index
    %3 = vector.load %arg1[%c32, %c0_3] : memref<544x256xbf16, #tpu.memory_space<vmem>>, vector<256x256xbf16>
    %c288 = arith.constant 288 : index
    %c0_4 = arith.constant 0 : index
    %4 = vector.load %arg1[%c288, %c0_4] : memref<544x256xbf16, #tpu.memory_space<vmem>>, vector<256x256xbf16>
    %cst = arith.constant dense<0.000000e+00> : vector<8x256xf32>
    %5 = tpu.matmul %1, %2, %cst {dimension_numbers = #tpu.dot_dimension_numbers<[1], [0], [0], [1], [0, 0, 1, 1], [], []>} : vector<8x32xbf16>, vector<32x256xbf16>, vector<8x256xf32> -> vector<8x256xf32>
    %c0_5 = arith.constant 0 : index
    %c0_6 = arith.constant 0 : index
    %6 = vector.load %arg2[%c0_5, %c0_6] : memref<8x256xf32, #tpu.memory_space<vmem>>, vector<1x256xf32>
    %c1 = arith.constant 1 : index
    %c0_7 = arith.constant 0 : index
    %7 = vector.load %arg2[%c1, %c0_7] : memref<8x256xf32, #tpu.memory_space<vmem>>, vector<1x256xf32>
    %cst_8 = arith.constant dense<0.000000e+00> : vector<256xf32>
    %8 = vector.multi_reduction <add>, %5, %cst_8 [0] : vector<8x256xf32> to vector<256xf32>
    %9 = vector.shape_cast %8 : vector<256xf32> to vector<1x256xf32>
    %cst_9 = arith.constant 8.000000e+00 : f32
    %10 = vector.broadcast %cst_9 : f32 to vector<1x256xf32>
    %11 = arith.divf %9, %10 : vector<1x256xf32>
    %12 = arith.mulf %5, %5 : vector<8x256xf32>
    %cst_10 = arith.constant dense<0.000000e+00> : vector<256xf32>
    %13 = vector.multi_reduction <add>, %12, %cst_10 [0] : vector<8x256xf32> to vector<256xf32>
    %14 = vector.shape_cast %13 : vector<256xf32> to vector<1x256xf32>
    %cst_11 = arith.constant 8.000000e+00 : f32
    %15 = vector.broadcast %cst_11 : f32 to vector<1x256xf32>
    %16 = arith.divf %14, %15 : vector<1x256xf32>
    %17 = arith.mulf %11, %11 : vector<1x256xf32>
    %18 = arith.subf %16, %17 : vector<1x256xf32>
    %cst_12 = arith.constant 0.000000e+00 : f32
    %19 = vector.broadcast %cst_12 : f32 to vector<1x256xf32>
    %20 = arith.maximumf %18, %19 : vector<1x256xf32>
    %cst_13 = arith.constant 9.99999974E-6 : f32
    %21 = vector.broadcast %cst_13 : f32 to vector<1x256xf32>
    %22 = arith.addf %20, %21 : vector<1x256xf32>
    %23 = math.rsqrt %22 : vector<1x256xf32>
    %24 = arith.mulf %6, %23 : vector<1x256xf32>
    %25 = arith.mulf %11, %24 : vector<1x256xf32>
    %26 = arith.subf %7, %25 : vector<1x256xf32>
    %27 = vector.broadcast %24 : vector<1x256xf32> to vector<8x256xf32>
    %28 = arith.mulf %5, %27 : vector<8x256xf32>
    %29 = vector.broadcast %26 : vector<1x256xf32> to vector<8x256xf32>
    %30 = arith.addf %28, %29 : vector<8x256xf32>
    %cst_14 = arith.constant 0.000000e+00 : f32
    %31 = vector.broadcast %cst_14 : f32 to vector<8x256xf32>
    %32 = arith.maximumf %30, %31 : vector<8x256xf32>
    %33 = arith.truncf %32 : vector<8x256xf32> to vector<8x256xbf16>
    %cst_15 = arith.constant dense<0.000000e+00> : vector<8x256xf32>
    %34 = tpu.matmul %33, %3, %cst_15 {dimension_numbers = #tpu.dot_dimension_numbers<[1], [0], [0], [1], [0, 0, 1, 1], [], []>} : vector<8x256xbf16>, vector<256x256xbf16>, vector<8x256xf32> -> vector<8x256xf32>
    %c2 = arith.constant 2 : index
    %c0_16 = arith.constant 0 : index
    %35 = vector.load %arg2[%c2, %c0_16] : memref<8x256xf32, #tpu.memory_space<vmem>>, vector<1x256xf32>
    %c3 = arith.constant 3 : index
    %c0_17 = arith.constant 0 : index
    %36 = vector.load %arg2[%c3, %c0_17] : memref<8x256xf32, #tpu.memory_space<vmem>>, vector<1x256xf32>
    %cst_18 = arith.constant dense<0.000000e+00> : vector<256xf32>
    %37 = vector.multi_reduction <add>, %34, %cst_18 [0] : vector<8x256xf32> to vector<256xf32>
    %38 = vector.shape_cast %37 : vector<256xf32> to vector<1x256xf32>
    %cst_19 = arith.constant 8.000000e+00 : f32
    %39 = vector.broadcast %cst_19 : f32 to vector<1x256xf32>
    %40 = arith.divf %38, %39 : vector<1x256xf32>
    %41 = arith.mulf %34, %34 : vector<8x256xf32>
    %cst_20 = arith.constant dense<0.000000e+00> : vector<256xf32>
    %42 = vector.multi_reduction <add>, %41, %cst_20 [0] : vector<8x256xf32> to vector<256xf32>
    %43 = vector.shape_cast %42 : vector<256xf32> to vector<1x256xf32>
    %cst_21 = arith.constant 8.000000e+00 : f32
    %44 = vector.broadcast %cst_21 : f32 to vector<1x256xf32>
    %45 = arith.divf %43, %44 : vector<1x256xf32>
    %46 = arith.mulf %40, %40 : vector<1x256xf32>
    %47 = arith.subf %45, %46 : vector<1x256xf32>
    %cst_22 = arith.constant 0.000000e+00 : f32
    %48 = vector.broadcast %cst_22 : f32 to vector<1x256xf32>
    %49 = arith.maximumf %47, %48 : vector<1x256xf32>
    %cst_23 = arith.constant 9.99999974E-6 : f32
    %50 = vector.broadcast %cst_23 : f32 to vector<1x256xf32>
    %51 = arith.addf %49, %50 : vector<1x256xf32>
    %52 = math.rsqrt %51 : vector<1x256xf32>
    %53 = arith.mulf %35, %52 : vector<1x256xf32>
    %54 = arith.mulf %40, %53 : vector<1x256xf32>
    %55 = arith.subf %36, %54 : vector<1x256xf32>
    %56 = vector.broadcast %53 : vector<1x256xf32> to vector<8x256xf32>
    %57 = arith.mulf %34, %56 : vector<8x256xf32>
    %58 = vector.broadcast %55 : vector<1x256xf32> to vector<8x256xf32>
    %59 = arith.addf %57, %58 : vector<8x256xf32>
    %cst_24 = arith.constant 0.000000e+00 : f32
    %60 = vector.broadcast %cst_24 : f32 to vector<8x256xf32>
    %61 = arith.maximumf %59, %60 : vector<8x256xf32>
    %62 = arith.truncf %61 : vector<8x256xf32> to vector<8x256xbf16>
    %cst_25 = arith.constant dense<0.000000e+00> : vector<8x256xf32>
    %63 = tpu.matmul %62, %4, %cst_25 {dimension_numbers = #tpu.dot_dimension_numbers<[1], [0], [0], [1], [0, 0, 1, 1], [], []>} : vector<8x256xbf16>, vector<256x256xbf16>, vector<8x256xf32> -> vector<8x256xf32>
    %c4 = arith.constant 4 : index
    %c0_26 = arith.constant 0 : index
    %64 = vector.load %arg2[%c4, %c0_26] : memref<8x256xf32, #tpu.memory_space<vmem>>, vector<1x256xf32>
    %65 = vector.broadcast %64 : vector<1x256xf32> to vector<8x256xf32>
    %66 = arith.addf %63, %65 : vector<8x256xf32>
    %c0_27 = arith.constant 0 : index
    %c0_28 = arith.constant 0 : index
    %67 = vector.load %arg3[%c0_27, %c0_28] : memref<8x256xf32, #tpu.memory_space<vmem>>, vector<8x256xf32>
    tpu.vector_store %arg3[%c0_27, %c0_28], %66 {strides = array<i32>} : memref<8x256xf32, #tpu.memory_space<vmem>>, vector<8x256xf32>,
    return
  }
}

</mosaic_0001>

<llo_original>
// kernel: tpu_custom_call.1
$region0: #{tpu_custom_call.1}
  #allocation0 [shape = 'u32[]', space=smem, size = 0x4, offset = 0x4, fixed_abs, tag = 'smem constant byte address 0x4 - core index']
  #allocation1 [shape = 'u32[144,128]{1,0:T(1,128)}', space=vmem, size = 0x12000, scoped, tag = 'internal scratch']
  %s0 = inlined_call_operand.hbm [shape: f32[8,32], index: 0, kind: input, shape index: {}]
  %s1 = inlined_call_operand.hbm [shape: bf16[544,256], index: 1, kind: input, shape index: {}]
  %s2 = inlined_call_operand.hbm [shape: f32[8,256], index: 2, kind: input, shape index: {}]
  %s3 = inlined_call_operand.hbm [shape: f32[8,256], index: 3, kind: output, shape index: {}]
  %s4 = sld [smem:[#allocation0]]
  $region34: #{tpu_custom_call.1} parent=0
    _
  %s6 = ssub.s32 1, %s4
  %s7 = scalar_select 0, %s6, %s4
  $region1: #{tpu_custom_call.1} parent=0
    #allocation2 [shape = 'u8[4096]{0}', space=vmem, size = 0x1000, scoped, tag = 'input window, operand 0, single buffered']
    #allocation3 [shape = 's32[1]{0}', space=sflag, size = 0x4, scoped, tag = 'scoped memory for tpu_custom_call.1']
    #allocation4 [shape = 's32[1]{0}', space=sflag, size = 0x4, scoped, tag = 'scoped memory for tpu_custom_call.1']
    #allocation5 [shape = 'u8[278528]{0}', space=vmem, size = 0x44000, scoped, tag = 'input window, operand 1, single buffered']
    #allocation6 [shape = 's32[1]{0}', space=sflag, size = 0x4, scoped, tag = 'scoped memory for tpu_custom_call.1']
    #allocation7 [shape = 'u8[8192]{0}', space=vmem, size = 0x2000, scoped, tag = 'input window, operand 2, single buffered']
    #allocation8 [shape = 'u8[8192]{0}', space=vmem, size = 0x2000, scoped, tag = 'output window, operand 0, single buffered']
    %8 = vsyncpa [#allocation3], 0
    %9 = vsyncpa [#allocation6], 0
    %10 = vsyncpa [#allocation4], 0
    // Predicated region
    $region2: #{tpu_custom_call.1} parent=1 // pred_check
      _
    $region3: #{tpu_custom_call.1} parent=1 // pred_check_branch
      %12 = sbr.rel (0) target = $region5
    $region4: #{tpu_custom_call.1} parent=1 // pred_region
      %s14 = ssub.s32 128, 128
      %15 = vsyncadd [#allocation3], %s14
      %s17 = sshll.u32 [#allocation2], 4
      %s18 = int_to_ptr.vmem [resolvable:$true] %s17
      %20 = dma.hbm_to_vmem [thread:$0]  %s0, 128, %s18, [#allocation3]
    $region5: #{tpu_custom_call.1} parent=1 // pred_fallthru
      _
    // Predicated region
    $region6: #{tpu_custom_call.1} parent=1 // pred_check
      _
    $region7: #{tpu_custom_call.1} parent=1 // pred_check_branch
      %22 = sbr.rel (0) target = $region9
    $region8: #{tpu_custom_call.1} parent=1 // pred_region
      %s24 = ssub.s32 8704, 8704
      %25 = vsyncadd [#allocation6], %s24
      %s26 = sshll.u32 [#allocation5], 4
      %s27 = int_to_ptr.vmem [resolvable:$true] %s26
      %32 = dma.hbm_to_vmem [thread:$0]  %s1, 8704, %s27, [#allocation6], 128, 128, 8
    $region9: #{tpu_custom_call.1} parent=1 // pred_fallthru
      _
    // Predicated region
    $region10: #{tpu_custom_call.1} parent=1 // pred_check
      _
    $region11: #{tpu_custom_call.1} parent=1 // pred_check_branch
      %34 = sbr.rel (0) target = $region13
    $region12: #{tpu_custom_call.1} parent=1 // pred_region
      %s36 = ssub.s32 256, 256
      %37 = vsyncadd [#allocation6], %s36
      %s39 = sshll.u32 [#allocation7], 4
      %s40 = int_to_ptr.vmem [resolvable:$true] %s39
      %42 = dma.hbm_to_vmem [thread:$0]  %s2, 256, %s40, [#allocation6]
    $region13: #{tpu_custom_call.1} parent=1 // pred_fallthru
      _
    // Predicated region
    $region14: #{tpu_custom_call.1} parent=1 // pred_check
      _
    $region15: #{tpu_custom_call.1} parent=1 // pred_check_branch
      %44 = sbr.rel (0) target = $region17
    $region16: #{tpu_custom_call.1} parent=1 // pred_region
      %45 = dma.done [#allocation3], 128
    $region17: #{tpu_custom_call.1} parent=1 // pred_fallthru
      _
    // Predicated region
    $region18: #{tpu_custom_call.1} parent=1 // pred_check
      _
    $region19: #{tpu_custom_call.1} parent=1 // pred_check_branch
      %47 = sbr.rel (0) target = $region21
    $region20: #{tpu_custom_call.1} parent=1 // pred_region
      %48 = dma.done [#allocation6], 8704
    $region21: #{tpu_custom_call.1} parent=1 // pred_fallthru
      _
    // Predicated region
    $region22: #{tpu_custom_call.1} parent=1 // pred_check
      _
    $region23: #{tpu_custom_call.1} parent=1 // pred_check_branch
      %50 = sbr.rel (0) target = $region25
    $region24: #{tpu_custom_call.1} parent=1 // pred_region
      %51 = dma.done [#allocation6], 256
    $region25: #{tpu_custom_call.1} parent=1 // pred_fallthru
      _
    %v53 = vld [vmem:[#allocation2] sm:$0xff]
    %v54 = vpack.c.bf16 %v53, %v53
    %v55 = vld [vmem:[#allocation5] sm:$0xff]
    %v56 = vld [vmem:[#allocation5 + $0x8] sm:$0xff]
    %v57 = vld [vmem:[#allocation5 + $0x10] sm:$0xff]
    %v58 = vld [vmem:[#allocation5 + $0x18] sm:$0xff]
    %v59 = vld [vmem:[#allocation5 + $0x20] sm:$0xff]
    %v60 = vld [vmem:[#allocation5 + $0x28] sm:$0xff]
    %v61 = vld [vmem:[#allocation5 + $0x30] sm:$0xff]
    %v62 = vld [vmem:[#allocation5 + $0x38] sm:$0xff]
    %v63 = vld [vmem:[#allocation5 + $0x40] sm:$0xff]
    %v64 = vld [vmem:[#allocation5 + $0x48] sm:$0xff]
    %v65 = vld [vmem:[#allocation5 + $0x50] sm:$0xff]
    %v66 = vld [vmem:[#allocation5 + $0x58] sm:$0xff]
    %v67 = vld [vmem:[#allocation5 + $0x60] sm:$0xff]
    %v68 = vld [vmem:[#allocation5 + $0x68] sm:$0xff]
    %v69 = vld [vmem:[#allocation5 + $0x70] sm:$0xff]
    %v70 = vld [vmem:[#allocation5 + $0x78] sm:$0xff]
    %v71 = vld [vmem:[#allocation5 + $0x80] sm:$0xff]
    %v72 = vld [vmem:[#allocation5 + $0x88] sm:$0xff]
    %v73 = vld [vmem:[#allocation5 + $0x90] sm:$0xff]
    %v74 = vld [vmem:[#allocation5 + $0x98] sm:$0xff]
    %v75 = vld [vmem:[#allocation5 + $0xa0] sm:$0xff]
    %v76 = vld [vmem:[#allocation5 + $0xa8] sm:$0xff]
    %v77 = vld [vmem:[#allocation5 + $0xb0] sm:$0xff]
    %v78 = vld [vmem:[#allocation5 + $0xb8] sm:$0xff]
    %v79 = vld [vmem:[#allocation5 + $0xc0] sm:$0xff]
    %v80 = vld [vmem:[#allocation5 + $0xc8] sm:$0xff]
    %v81 = vld [vmem:[#allocation5 + $0xd0] sm:$0xff]
    %v82 = vld [vmem:[#allocation5 + $0xd8] sm:$0xff]
    %v83 = vld [vmem:[#allocation5 + $0xe0] sm:$0xff]
    %v84 = vld [vmem:[#allocation5 + $0xe8] sm:$0xff]
    %v85 = vld [vmem:[#allocation5 + $0xf0] sm:$0xff]
    %v86 = vld [vmem:[#allocation5 + $0xf8] sm:$0xff]
    %v87 = vld [vmem:[#allocation5 + $0x100] sm:$0xff]
    %v88 = vld [vmem:[#allocation5 + $0x108] sm:$0xff]
    %v89 = vld [vmem:[#allocation5 + $0x110] sm:$0xff]
    %v90 = vld [vmem:[#allocation5 + $0x118] sm:$0xff]
    %v91 = vld [vmem:[#allocation5 + $0x120] sm:$0xff]
    %v92 = vld [vmem:[#allocation5 + $0x128] sm:$0xff]
    %v93 = vld [vmem:[#allocation5 + $0x130] sm:$0xff]
    %v94 = vld [vmem:[#allocation5 + $0x138] sm:$0xff]
    %v95 = vld [vmem:[#allocation5 + $0x140] sm:$0xff]
    %v96 = vld [vmem:[#allocation5 + $0x148] sm:$0xff]
    %v97 = vld [vmem:[#allocation5 + $0x150] sm:$0xff]
    %v98 = vld [vmem:[#allocation5 + $0x158] sm:$0xff]
    %v99 = vld [vmem:[#allocation5 + $0x160] sm:$0xff]
    %v100 = vld [vmem:[#allocation5 + $0x168] sm:$0xff]
    %v101 = vld [vmem:[#allocation5 + $0x170] sm:$0xff]
    %v102 = vld [vmem:[#allocation5 + $0x178] sm:$0xff]
    %v103 = vld [vmem:[#allocation5 + $0x180] sm:$0xff]
    %v104 = vld [vmem:[#allocation5 + $0x188] sm:$0xff]
    %v105 = vld [vmem:[#allocation5 + $0x190] sm:$0xff]
    %v106 = vld [vmem:[#allocation5 + $0x198] sm:$0xff]
    %v107 = vld [vmem:[#allocation5 + $0x1a0] sm:$0xff]
    %v108 = vld [vmem:[#allocation5 + $0x1a8] sm:$0xff]
    %v109 = vld [vmem:[#allocation5 + $0x1b0] sm:$0xff]
    %v110 = vld [vmem:[#allocation5 + $0x1b8] sm:$0xff]
    %v111 = vld [vmem:[#allocation5 + $0x1c0] sm:$0xff]
    %v112 = vld [vmem:[#allocation5 + $0x1c8] sm:$0xff]
    %v113 = vld [vmem:[#allocation5 + $0x1d0] sm:$0xff]
    %v114 = vld [vmem:[#allocation5 + $0x1d8] sm:$0xff]
    %v115 = vld [vmem:[#allocation5 + $0x1e0] sm:$0xff]
    %v116 = vld [vmem:[#allocation5 + $0x1e8] sm:$0xff]
    %v117 = vld [vmem:[#allocation5 + $0x1f0] sm:$0xff]
    %v118 = vld [vmem:[#allocation5 + $0x1f8] sm:$0xff]
    %v119 = vld [vmem:[#allocation5 + $0x200] sm:$0xff]
    %v120 = vld [vmem:[#allocation5 + $0x208] sm:$0xff]
    %v121 = vld [vmem:[#allocation5 + $0x210] sm:$0xff]
    %v122 = vld [vmem:[#allocation5 + $0x218] sm:$0xff]
    %v127 = vunpack.c.l.b16 %v55
    %v128 = vunpack.c.h.b16 %v55
    %v129 = vunpack.c.l.b16 %v56
    %v130 = vunpack.c.h.b16 %v56
    %v131 = vunpack.c.l.b16 %v57
    %v132 = vunpack.c.h.b16 %v57
    %v133 = vunpack.c.l.b16 %v58
    %v134 = vunpack.c.h.b16 %v58
    %v135 = vpack.c.b16 %v129, %v127
    %v136 = vpack.c.b16 %v130, %v128
    %v137 = vpack.c.b16 %v133, %v131
    %v138 = vpack.c.b16 %v134, %v132
    %vm143 = vcmask 261120
    %v145 = vsel %vm143, %v54, 0
    %147 = vmatprep.subr.bf16.mxu0 0
    %148 = vmatpush1.bf16.msra.mxu0 0
    %149 = vmatprep.subr.bf16.mxu0 0
    %150 = vmatpush1.bf16.msra.mxu0 0
    %151 = vmatprep.subr.bf16.mxu0 0
    %152 = vmatpush1.bf16.msra.mxu0 0
    %153 = vmatprep.subr.bf16.mxu0 0
    %154 = vmatpush1.bf16.msra.mxu0 0
    %155 = vmatprep.subr.bf16.mxu0 0
    %156 = vmatpush1.bf16.msra.mxu0 0
    %157 = vmatprep.subr.bf16.mxu0 0
    %158 = vmatpush1.bf16.msra.mxu0 0
    %159 = vmatprep.subr.bf16.mxu0 %v138
    %160 = vmatpush1.bf16.msra.mxu0 %v137
    %161 = vmatprep.subr.bf16.mxu0 %v136
    %162 = vmatpush1.bf16.msra.mxu0 %v135
    %163 = vmatprep.subr.bf16.mxu0 0
    %164 = vmatpush2.bf16.msra.mxu0 0
    %165 = vmatprep.subr.bf16.mxu0 0
    %166 = vmatpush2.bf16.msra.mxu0 0
    %167 = vmatprep.subr.bf16.mxu0 0
    %168 = vmatpush2.bf16.msra.mxu0 0
    %169 = vmatprep.subr.bf16.mxu0 0
    %170 = vmatpush2.bf16.msra.mxu0 0
    %171 = vmatprep.subr.bf16.mxu0 0
    %172 = vmatpush2.bf16.msra.mxu0 0
    %173 = vmatprep.subr.bf16.mxu0 0
    %174 = vmatpush2.bf16.msra.mxu0 0
    %175 = vmatprep.subr.bf16.mxu0 0
    %176 = vmatpush2.bf16.msra.mxu0 0
    %177 = vmatprep.subr.bf16.mxu0 0
    %178 = vmatpush2.bf16.msra.mxu0 0
    %179 = vmatprep.mubr.bf16.mxu0 0
    %180 = vmatmul.mubr.bf16.gmra.mxu0 %v145
    %v181 = vpop.f32.mrf.mxu0
    %v182 = vadd.f32 0.0, %v181
    %v183 = vpop.f32.mrf.mxu0
    %v184 = vadd.f32 0.0, %v183
    %v185 = vpop.f32.mrf.mxu0
    %v186 = vpop.f32.mrf.mxu0
    %187 = vdwg.mxu0
    %v188 = vld [vmem:[#allocation7] ss:$8 sm:$0x3]
    %s189 = scalar_lea.vmem [#allocation7], 1
    %v190 = vld [vmem:[%s189] ss:$8 sm:$0x3]
    %v191 = vrot.slane %v182, 4
    %v192 = vadd.f32 %v182, %v191
    %v193 = vrot.slane %v192, 2
    %v194 = vadd.f32 %v192, %v193
    %v195 = vrot.slane %v194, 1
    %v196 = vadd.f32 %v194, %v195
    %v197 = vrot.slane %v184, 4
    %v198 = vadd.f32 %v184, %v197
    %v199 = vrot.slane %v198, 2
    %v200 = vadd.f32 %v198, %v199
    %v201 = vrot.slane %v200, 1
    %v202 = vadd.f32 %v200, %v201
    %v203 = vrcp.pop 8.0
    %v204 = vmul.f32 %v196, %v203
    %v205 = vmul.f32 %v202, %v203
    %v206 = vmul.f32 %v182, %v182
    %v207 = vmul.f32 %v184, %v184
    %v208 = vrot.slane %v206, 4
    %v209 = vadd.f32 %v206, %v208
    %v210 = vrot.slane %v209, 2
    %v211 = vadd.f32 %v209, %v210
    %v212 = vrot.slane %v211, 1
    %v213 = vadd.f32 %v211, %v212
    %v214 = vrot.slane %v207, 4
    %v215 = vadd.f32 %v207, %v214
    %v216 = vrot.slane %v215, 2
    %v217 = vadd.f32 %v215, %v216
    %v218 = vrot.slane %v217, 1
    %v219 = vadd.f32 %v217, %v218
    %v220 = vmul.f32 %v213, %v203
    %v221 = vmul.f32 %v219, %v203
    %v222 = vmul.f32 %v204, %v204
    %v223 = vmul.f32 %v205, %v205
    %v224 = vsub.f32 %v220, %v222
    %v225 = vsub.f32 %v221, %v223
    %v226 = vmax.f32 %v224, 0.0
    %v227 = vmax.f32 %v225, 0.0
    %v228 = vadd.f32 %v226, 1e-05
    %v229 = vadd.f32 %v227, 1e-05
    %v230 = vrsqrt.pop %v228
    %v231 = vrsqrt.pop %v229
    %v234 = vcombine.low %v230, %v231
    %v236 = vunpack.c.l.s4 1966171168
    %v237 = vunpack.c.0.s8 %v236
    %v238 = vlaneseq
    %v239 = vshrl.u32 %v238, 7
    %v240 = vsub.s32 %v237, %v239
    %v241 = vrot.slane %v234, %v240
    %v243 = vunpack.c.l.s4 1966171168
    %v244 = vunpack.c.0.s8 %v243
    %v245 = vlaneseq
    %v246 = vshrl.u32 %v245, 7
    %v247 = vsub.s32 %v244, %v246
    %v248 = vrot.slane %v241, %v247
    %v250 = vmul.f32 %v188, %v248
    %v252 = vlaneseq
    %v253 = vshrl.u32 %v252, 7
    %v254 = vsub.s32 0, %v253
    %v255 = vrot.slane %v250, %v254
    %v256 = vlaneseq
    %v257 = vshrl.u32 %v256, 7
    %v258 = vsub.s32 1, %v257
    %v259 = vrot.slane %v250, %v258
    %v262 = vmul.f32 %v204, %v255
    %v263 = vmul.f32 %v205, %v259
    %v266 = vcombine.low %v262, %v263
    %v268 = vunpack.c.l.s4 1966171168
    %v269 = vunpack.c.0.s8 %v268
    %v270 = vlaneseq
    %v271 = vshrl.u32 %v270, 7
    %v272 = vsub.s32 %v269, %v271
    %v273 = vrot.slane %v266, %v272
    %v275 = vunpack.c.l.s4 1966171168
    %v276 = vunpack.c.0.s8 %v275
    %v277 = vlaneseq
    %v278 = vshrl.u32 %v277, 7
    %v279 = vsub.s32 %v276, %v278
    %v280 = vrot.slane %v273, %v279
    %v282 = vsub.f32 %v190, %v280
    %v283 = vmul.f32 %v182, %v255
    %v284 = vmul.f32 %v184, %v259
    %v286 = vlaneseq
    %v287 = vshrl.u32 %v286, 7
    %v288 = vsub.s32 0, %v287
    %v289 = vrot.slane %v282, %v288
    %v290 = vlaneseq
    %v291 = vshrl.u32 %v290, 7
    %v292 = vsub.s32 1, %v291
    %v293 = vrot.slane %v282, %v292
    %v296 = vadd.f32 %v283, %v289
    %v297 = vadd.f32 %v284, %v293
    %v298 = vmax.f32 %v296, 0.0
    %v299 = vmax.f32 %v297, 0.0
    %v300 = vpack.c.bf16 %v298, %v298
    %v301 = vpack.c.bf16 %v299, %v299
    %v334 = vunpack.c.l.b16 %v59
    %v335 = vunpack.c.h.b16 %v59
    %v336 = vunpack.c.l.b16 %v60
    %v337 = vunpack.c.h.b16 %v60
    %v338 = vunpack.c.l.b16 %v61
    %v339 = vunpack.c.h.b16 %v61
    %v340 = vunpack.c.l.b16 %v62
    %v341 = vunpack.c.h.b16 %v62
    %v342 = vunpack.c.l.b16 %v63
    %v343 = vunpack.c.h.b16 %v63
    %v344 = vunpack.c.l.b16 %v64
    %v345 = vunpack.c.h.b16 %v64
    %v346 = vunpack.c.l.b16 %v65
    %v347 = vunpack.c.h.b16 %v65
    %v348 = vunpack.c.l.b16 %v66
    %v349 = vunpack.c.h.b16 %v66
    %v350 = vunpack.c.l.b16 %v67
    %v351 = vunpack.c.h.b16 %v67
    %v352 = vunpack.c.l.b16 %v68
    %v353 = vunpack.c.h.b16 %v68
    %v354 = vunpack.c.l.b16 %v69
    %v355 = vunpack.c.h.b16 %v69
    %v356 = vunpack.c.l.b16 %v70
    %v357 = vunpack.c.h.b16 %v70
    %v358 = vunpack.c.l.b16 %v71
    %v359 = vunpack.c.h.b16 %v71
    %v360 = vunpack.c.l.b16 %v72
    %v361 = vunpack.c.h.b16 %v72
    %v362 = vunpack.c.l.b16 %v73
    %v363 = vunpack.c.h.b16 %v73
    %v364 = vunpack.c.l.b16 %v74
    %v365 = vunpack.c.h.b16 %v74
    %v366 = vunpack.c.l.b16 %v75
    %v367 = vunpack.c.h.b16 %v75
    %v368 = vunpack.c.l.b16 %v76
    %v369 = vunpack.c.h.b16 %v76
    %v370 = vunpack.c.l.b16 %v77
    %v371 = vunpack.c.h.b16 %v77
    %v372 = vunpack.c.l.b16 %v78
    %v373 = vunpack.c.h.b16 %v78
    %v374 = vunpack.c.l.b16 %v79
    %v375 = vunpack.c.h.b16 %v79
    %v376 = vunpack.c.l.b16 %v80
    %v377 = vunpack.c.h.b16 %v80
    %v378 = vunpack.c.l.b16 %v81
    %v379 = vunpack.c.h.b16 %v81
    %v380 = vunpack.c.l.b16 %v82
    %v381 = vunpack.c.h.b16 %v82
    %v382 = vunpack.c.l.b16 %v83
    %v383 = vunpack.c.h.b16 %v83
    %v384 = vunpack.c.l.b16 %v84
    %v385 = vunpack.c.h.b16 %v84
    %v386 = vunpack.c.l.b16 %v85
    %v387 = vunpack.c.h.b16 %v85
    %v388 = vunpack.c.l.b16 %v86
    %v389 = vunpack.c.h.b16 %v86
    %v390 = vunpack.c.l.b16 %v87
    %v391 = vunpack.c.h.b16 %v87
    %v392 = vunpack.c.l.b16 %v88
    %v393 = vunpack.c.h.b16 %v88
    %v394 = vunpack.c.l.b16 %v89
    %v395 = vunpack.c.h.b16 %v89
    %v396 = vunpack.c.l.b16 %v90
    %v397 = vunpack.c.h.b16 %v90
    %v398 = vpack.c.b16 %v336, %v334
    %v399 = vpack.c.b16 %v337, %v335
    %v400 = vpack.c.b16 %v340, %v338
    %v401 = vpack.c.b16 %v341, %v339
    %v402 = vpack.c.b16 %v344, %v342
    %v403 = vpack.c.b16 %v345, %v343
    %v404 = vpack.c.b16 %v348, %v346
    %v405 = vpack.c.b16 %v349, %v347
    %v406 = vpack.c.b16 %v352, %v350
    %v407 = vpack.c.b16 %v353, %v351
    %v408 = vpack.c.b16 %v356, %v354
    %v409 = vpack.c.b16 %v357, %v355
    %v410 = vpack.c.b16 %v360, %v358
    %v411 = vpack.c.b16 %v361, %v359
    %v412 = vpack.c.b16 %v364, %v362
    %v413 = vpack.c.b16 %v365, %v363
    %v414 = vpack.c.b16 %v368, %v366
    %v415 = vpack.c.b16 %v369, %v367
    %v416 = vpack.c.b16 %v372, %v370
    %v417 = vpack.c.b16 %v373, %v371
    %v418 = vpack.c.b16 %v376, %v374
    %v419 = vpack.c.b16 %v377, %v375
    %v420 = vpack.c.b16 %v380, %v378
    %v421 = vpack.c.b16 %v381, %v379
    %v422 = vpack.c.b16 %v384, %v382
    %v423 = vpack.c.b16 %v385, %v383
    %v424 = vpack.c.b16 %v388, %v386
    %v425 = vpack.c.b16 %v389, %v387
    %v426 = vpack.c.b16 %v392, %v390
    %v427 = vpack.c.b16 %v393, %v391
    %v428 = vpack.c.b16 %v396, %v394
    %v429 = vpack.c.b16 %v397, %v395
    %462 = vmatprep.subr.bf16.mxu0 %v413
    %463 = vmatpush1.bf16.msra.mxu0 %v412
    %464 = vmatprep.subr.bf16.mxu0 %v411
    %465 = vmatpush1.bf16.msra.mxu0 %v410
    %466 = vmatprep.subr.bf16.mxu0 %v409
    %467 = vmatpush1.bf16.msra.mxu0 %v408
    %468 = vmatprep.subr.bf16.mxu0 %v407
    %469 = vmatpush1.bf16.msra.mxu0 %v406
    %470 = vmatprep.subr.bf16.mxu0 %v405
    %471 = vmatpush1.bf16.msra.mxu0 %v404
    %472 = vmatprep.subr.bf16.mxu0 %v403
    %473 = vmatpush1.bf16.msra.mxu0 %v402
    %474 = vmatprep.subr.bf16.mxu0 %v401
    %475 = vmatpush1.bf16.msra.mxu0 %v400
    %476 = vmatprep.subr.bf16.mxu0 %v399
    %477 = vmatpush1.bf16.msra.mxu0 %v398
    %478 = vmatprep.subr.bf16.mxu0 %v429
    %479 = vmatpush2.bf16.msra.mxu0 %v428
    %480 = vmatprep.subr.bf16.mxu0 %v427
    %481 = vmatpush2.bf16.msra.mxu0 %v426
    %482 = vmatprep.subr.bf16.mxu0 %v425
    %483 = vmatpush2.bf16.msra.mxu0 %v424
    %484 = vmatprep.subr.bf16.mxu0 %v423
    %485 = vmatpush2.bf16.msra.mxu0 %v422
    %486 = vmatprep.subr.bf16.mxu0 %v421
    %487 = vmatpush2.bf16.msra.mxu0 %v420
    %488 = vmatprep.subr.bf16.mxu0 %v419
    %489 = vmatpush2.bf16.msra.mxu0 %v418
    %490 = vmatprep.subr.bf16.mxu0 %v417
    %491 = vmatpush2.bf16.msra.mxu0 %v416
    %492 = vmatprep.subr.bf16.mxu0 %v415
    %493 = vmatpush2.bf16.msra.mxu0 %v414
    %494 = vmatprep.mubr.bf16.mxu0 %v301
    %495 = vmatmul.mubr.bf16.gmra.mxu0 %v300
    %v496 = vpop.f32.mrf.mxu0
    %v497 = vadd.f32 0.0, %v496
    %v498 = vpop.f32.mrf.mxu0
    %v499 = vadd.f32 0.0, %v498
    %v500 = vpop.f32.mrf.mxu0
    %v501 = vpop.f32.mrf.mxu0
    %502 = vdwg.mxu0
    %s503 = scalar_lea.vmem [#allocation7], 2
    %v504 = vld [vmem:[%s503] ss:$8 sm:$0x3]
    %s505 = scalar_lea.vmem [#allocation7], 3
    %v506 = vld [vmem:[%s505] ss:$8 sm:$0x3]
    %v507 = vrot.slane %v497, 4
    %v508 = vadd.f32 %v497, %v507
    %v509 = vrot.slane %v508, 2
    %v510 = vadd.f32 %v508, %v509
    %v511 = vrot.slane %v510, 1
    %v512 = vadd.f32 %v510, %v511
    %v513 = vrot.slane %v499, 4
    %v514 = vadd.f32 %v499, %v513
    %v515 = vrot.slane %v514, 2
    %v516 = vadd.f32 %v514, %v515
    %v517 = vrot.slane %v516, 1
    %v518 = vadd.f32 %v516, %v517
    %v519 = vmul.f32 %v512, %v203
    %v520 = vmul.f32 %v518, %v203
    %v521 = vmul.f32 %v497, %v497
    %v522 = vmul.f32 %v499, %v499
    %v523 = vrot.slane %v521, 4
    %v524 = vadd.f32 %v521, %v523
    %v525 = vrot.slane %v524, 2
    %v526 = vadd.f32 %v524, %v525
    %v527 = vrot.slane %v526, 1
    %v528 = vadd.f32 %v526, %v527
    %v529 = vrot.slane %v522, 4
    %v530 = vadd.f32 %v522, %v529
    %v531 = vrot.slane %v530, 2
    %v532 = vadd.f32 %v530, %v531
    %v533 = vrot.slane %v532, 1
    %v534 = vadd.f32 %v532, %v533
    %v535 = vmul.f32 %v528, %v203
    %v536 = vmul.f32 %v534, %v203
    %v537 = vmul.f32 %v519, %v519
    %v538 = vmul.f32 %v520, %v520
    %v539 = vsub.f32 %v535, %v537
    %v540 = vsub.f32 %v536, %v538
    %v541 = vmax.f32 %v539, 0.0
    %v542 = vmax.f32 %v540, 0.0
    %v543 = vadd.f32 %v541, 1e-05
    %v544 = vadd.f32 %v542, 1e-05
    %v545 = vrsqrt.pop %v543
    %v546 = vrsqrt.pop %v544
    %v549 = vcombine.low %v545, %v546
    %v551 = vunpack.c.l.s4 1966171168
    %v552 = vunpack.c.0.s8 %v551
    %v553 = vlaneseq
    %v554 = vshrl.u32 %v553, 7
    %v555 = vsub.s32 %v552, %v554
    %v556 = vrot.slane %v549, %v555
    %v558 = vunpack.c.l.s4 1966171168
    %v559 = vunpack.c.0.s8 %v558
    %v560 = vlaneseq
    %v561 = vshrl.u32 %v560, 7
    %v562 = vsub.s32 %v559, %v561
    %v563 = vrot.slane %v556, %v562
    %v565 = vmul.f32 %v504, %v563
    %v567 = vlaneseq
    %v568 = vshrl.u32 %v567, 7
    %v569 = vsub.s32 0, %v568
    %v570 = vrot.slane %v565, %v569
    %v571 = vlaneseq
    %v572 = vshrl.u32 %v571, 7
    %v573 = vsub.s32 1, %v572
    %v574 = vrot.slane %v565, %v573
    %v577 = vmul.f32 %v519, %v570
    %v578 = vmul.f32 %v520, %v574
    %v581 = vcombine.low %v577, %v578
    %v583 = vunpack.c.l.s4 1966171168
    %v584 = vunpack.c.0.s8 %v583
    %v585 = vlaneseq
    %v586 = vshrl.u32 %v585, 7
    %v587 = vsub.s32 %v584, %v586
    %v588 = vrot.slane %v581, %v587
    %v590 = vunpack.c.l.s4 1966171168
    %v591 = vunpack.c.0.s8 %v590
    %v592 = vlaneseq
    %v593 = vshrl.u32 %v592, 7
    %v594 = vsub.s32 %v591, %v593
    %v595 = vrot.slane %v588, %v594
    %v597 = vsub.f32 %v506, %v595
    %v598 = vmul.f32 %v497, %v570
    %v599 = vmul.f32 %v499, %v574
    %v601 = vlaneseq
    %v602 = vshrl.u32 %v601, 7
    %v603 = vsub.s32 0, %v602
    %v604 = vrot.slane %v597, %v603
    %v605 = vlaneseq
    %v606 = vshrl.u32 %v605, 7
    %v607 = vsub.s32 1, %v606
    %v608 = vrot.slane %v597, %v607
    %v611 = vadd.f32 %v598, %v604
    %v612 = vadd.f32 %v599, %v608
    %v613 = vmax.f32 %v611, 0.0
    %v614 = vmax.f32 %v612, 0.0
    %v615 = vpack.c.bf16 %v613, %v613
    %v616 = vpack.c.bf16 %v614, %v614
    %s617 = scalar_lea.vmem [#allocation7], 4
    %v618 = vld [vmem:[%s617] ss:$8 sm:$0x3]
    %v620 = vlaneseq
    %v621 = vshrl.u32 %v620, 7
    %v622 = vsub.s32 0, %v621
    %v623 = vrot.slane %v618, %v622
    %v624 = vlaneseq
    %v625 = vshrl.u32 %v624, 7
    %v626 = vsub.s32 1, %v625
    %v627 = vrot.slane %v618, %v626
    %v662 = vunpack.c.l.b16 %v91
    %v663 = vunpack.c.h.b16 %v91
    %v664 = vunpack.c.l.b16 %v92
    %v665 = vunpack.c.h.b16 %v92
    %v666 = vunpack.c.l.b16 %v93
    %v667 = vunpack.c.h.b16 %v93
    %v668 = vunpack.c.l.b16 %v94
    %v669 = vunpack.c.h.b16 %v94
    %v670 = vunpack.c.l.b16 %v95
    %v671 = vunpack.c.h.b16 %v95
    %v672 = vunpack.c.l.b16 %v96
    %v673 = vunpack.c.h.b16 %v96
    %v674 = vunpack.c.l.b16 %v97
    %v675 = vunpack.c.h.b16 %v97
    %v676 = vunpack.c.l.b16 %v98
    %v677 = vunpack.c.h.b16 %v98
    %v678 = vunpack.c.l.b16 %v99
    %v679 = vunpack.c.h.b16 %v99
    %v680 = vunpack.c.l.b16 %v100
    %v681 = vunpack.c.h.b16 %v100
    %v682 = vunpack.c.l.b16 %v101
    %v683 = vunpack.c.h.b16 %v101
    %v684 = vunpack.c.l.b16 %v102
    %v685 = vunpack.c.h.b16 %v102
    %v686 = vunpack.c.l.b16 %v103
    %v687 = vunpack.c.h.b16 %v103
    %v688 = vunpack.c.l.b16 %v104
    %v689 = vunpack.c.h.b16 %v104
    %v690 = vunpack.c.l.b16 %v105
    %v691 = vunpack.c.h.b16 %v105
    %v692 = vunpack.c.l.b16 %v106
    %v693 = vunpack.c.h.b16 %v106
    %v694 = vunpack.c.l.b16 %v107
    %v695 = vunpack.c.h.b16 %v107
    %v696 = vunpack.c.l.b16 %v108
    %v697 = vunpack.c.h.b16 %v108
    %v698 = vunpack.c.l.b16 %v109
    %v699 = vunpack.c.h.b16 %v109
    %v700 = vunpack.c.l.b16 %v110
    %v701 = vunpack.c.h.b16 %v110
    %v702 = vunpack.c.l.b16 %v111
    %v703 = vunpack.c.h.b16 %v111
    %v704 = vunpack.c.l.b16 %v112
    %v705 = vunpack.c.h.b16 %v112
    %v706 = vunpack.c.l.b16 %v113
    %v707 = vunpack.c.h.b16 %v113
    %v708 = vunpack.c.l.b16 %v114
    %v709 = vunpack.c.h.b16 %v114
    %v710 = vunpack.c.l.b16 %v115
    %v711 = vunpack.c.h.b16 %v115
    %v712 = vunpack.c.l.b16 %v116
    %v713 = vunpack.c.h.b16 %v116
    %v714 = vunpack.c.l.b16 %v117
    %v715 = vunpack.c.h.b16 %v117
    %v716 = vunpack.c.l.b16 %v118
    %v717 = vunpack.c.h.b16 %v118
    %v718 = vunpack.c.l.b16 %v119
    %v719 = vunpack.c.h.b16 %v119
    %v720 = vunpack.c.l.b16 %v120
    %v721 = vunpack.c.h.b16 %v120
    %v722 = vunpack.c.l.b16 %v121
    %v723 = vunpack.c.h.b16 %v121
    %v724 = vunpack.c.l.b16 %v122
    %v725 = vunpack.c.h.b16 %v122
    %v726 = vpack.c.b16 %v664, %v662
    %v727 = vpack.c.b16 %v665, %v663
    %v728 = vpack.c.b16 %v668, %v666
    %v729 = vpack.c.b16 %v669, %v667
    %v730 = vpack.c.b16 %v672, %v670
    %v731 = vpack.c.b16 %v673, %v671
    %v732 = vpack.c.b16 %v676, %v674
    %v733 = vpack.c.b16 %v677, %v675
    %v734 = vpack.c.b16 %v680, %v678
    %v735 = vpack.c.b16 %v681, %v679
    %v736 = vpack.c.b16 %v684, %v682
    %v737 = vpack.c.b16 %v685, %v683
    %v738 = vpack.c.b16 %v688, %v686
    %v739 = vpack.c.b16 %v689, %v687
    %v740 = vpack.c.b16 %v692, %v690
    %v741 = vpack.c.b16 %v693, %v691
    %v742 = vpack.c.b16 %v696, %v694
    %v743 = vpack.c.b16 %v697, %v695
    %v744 = vpack.c.b16 %v700, %v698
    %v745 = vpack.c.b16 %v701, %v699
    %v746 = vpack.c.b16 %v704, %v702
    %v747 = vpack.c.b16 %v705, %v703
    %v748 = vpack.c.b16 %v708, %v706
    %v749 = vpack.c.b16 %v709, %v707
    %v750 = vpack.c.b16 %v712, %v710
    %v751 = vpack.c.b16 %v713, %v711
    %v752 = vpack.c.b16 %v716, %v714
    %v753 = vpack.c.b16 %v717, %v715
    %v754 = vpack.c.b16 %v720, %v718
    %v755 = vpack.c.b16 %v721, %v719
    %v756 = vpack.c.b16 %v724, %v722
    %v757 = vpack.c.b16 %v725, %v723
    %790 = vmatprep.subr.bf16.mxu0 %v741
    %791 = vmatpush1.bf16.msra.mxu0 %v740
    %792 = vmatprep.subr.bf16.mxu0 %v739
    %793 = vmatpush1.bf16.msra.mxu0 %v738
    %794 = vmatprep.subr.bf16.mxu0 %v737
    %795 = vmatpush1.bf16.msra.mxu0 %v736
    %796 = vmatprep.subr.bf16.mxu0 %v735
    %797 = vmatpush1.bf16.msra.mxu0 %v734
    %798 = vmatprep.subr.bf16.mxu0 %v733
    %799 = vmatpush1.bf16.msra.mxu0 %v732
    %800 = vmatprep.subr.bf16.mxu0 %v731
    %801 = vmatpush1.bf16.msra.mxu0 %v730
    %802 = vmatprep.subr.bf16.mxu0 %v729
    %803 = vmatpush1.bf16.msra.mxu0 %v728
    %804 = vmatprep.subr.bf16.mxu0 %v727
    %805 = vmatpush1.bf16.msra.mxu0 %v726
    %806 = vmatprep.subr.bf16.mxu0 %v757
    %807 = vmatpush2.bf16.msra.mxu0 %v756
    %808 = vmatprep.subr.bf16.mxu0 %v755
    %809 = vmatpush2.bf16.msra.mxu0 %v754
    %810 = vmatprep.subr.bf16.mxu0 %v753
    %811 = vmatpush2.bf16.msra.mxu0 %v752
    %812 = vmatprep.subr.bf16.mxu0 %v751
    %813 = vmatpush2.bf16.msra.mxu0 %v750
    %814 = vmatprep.subr.bf16.mxu0 %v749
    %815 = vmatpush2.bf16.msra.mxu0 %v748
    %816 = vmatprep.subr.bf16.mxu0 %v747
    %817 = vmatpush2.bf16.msra.mxu0 %v746
    %818 = vmatprep.subr.bf16.mxu0 %v745
    %819 = vmatpush2.bf16.msra.mxu0 %v744
    %820 = vmatprep.subr.bf16.mxu0 %v743
    %821 = vmatpush2.bf16.msra.mxu0 %v742
    %822 = vmatprep.mubr.bf16.mxu0 %v616
    %823 = vmatmul.mubr.bf16.gmra.mxu0 %v615
    %v824 = vpop.f32.mrf.mxu0
    %v825 = vadd.f32 %v623, %v824
    %v826 = vpop.f32.mrf.mxu0
    %v827 = vadd.f32 %v627, %v826
    %v828 = vpop.f32.mrf.mxu0
    %v829 = vpop.f32.mrf.mxu0
    %830 = vdwg.mxu0
    %831 = vst [vmem:[#allocation8] sm:$0xff] %v825
    %832 = vst [vmem:[#allocation8 + $0x8] sm:$0xff] %v827
    // Predicated region
    $region26: #{tpu_custom_call.1} parent=1 // pred_check
      _
    $region27: #{tpu_custom_call.1} parent=1 // pred_check_branch
      %834 = sbr.rel (0) target = $region29
    $region28: #{tpu_custom_call.1} parent=1 // pred_region
      %s836 = ssub.s32 256, 256
      %837 = vsyncadd [#allocation4], %s836
      %s839 = sshll.u32 [#allocation8], 4
      %s840 = int_to_ptr.vmem [resolvable:$true] %s839
      %842 = dma.vmem_to_hbm [thread:$0]  %s840, 256, %s3, [#allocation4]
    $region29: #{tpu_custom_call.1} parent=1 // pred_fallthru
      _
    // Predicated region
    $region30: #{tpu_custom_call.1} parent=1 // pred_check
      _
    $region31: #{tpu_custom_call.1} parent=1 // pred_check_branch
      %844 = sbr.rel (0) target = $region33
    $region32: #{tpu_custom_call.1} parent=1 // pred_region
      %845 = dma.done [#allocation4], 256
    $region33: #{tpu_custom_call.1} parent=1 // pred_fallthru
      _
    %846 = vsyncpa [#allocation3], 1
    %847 = vsyncpa [#allocation6], 1
    %848 = vsyncpa [#allocation4], 1

</llo_original>
